<compile_context>
chip_gen: v7x
topology: tpu7x:2x2x1
jax: 0.10.0
libtpu: 0.0.40
codegen_flags: <defaults>
</compile_context>

<pallas_src>
import jax
import jax.numpy as jnp
from jax.experimental import pallas as pl
from jax.experimental.pallas import tpu as pltpu


def _combine_kernel(pos_ref, tok_ref, w_ref, o_ref):
    # out = pos (= enc[dfn]@Wp.T + enc[dfn_fa]@Wp.T + b, precomputed) + tok @ Wt.T
    acc = jnp.dot(tok_ref[...], w_ref[...], preferred_element_type=jnp.float32)
    o_ref[...] = (acc + pos_ref[...]).astype(o_ref.dtype)


def _round_up(x, m):
    return (x + m - 1) // m * m


@jax.jit
def native_cat_position_embedding(dfn, dfn_fa, tokens, encoding, weight, bias):
    """dfn, dfn_fa: [B, P] int; tokens: [B, P, D]; encoding: [max_len, D];
    weight: [D, 2D] (torch nn.Linear layout); bias: [D]."""
    n_batch, n_part, d_model = tokens.shape
    n = n_batch * n_part

    # ---- algebraic folds, done once in the wrapper (tiny, fused by XLA) ----
    enc_f32 = encoding.astype(jnp.float32)
    w_f32 = weight.astype(jnp.float32)
    t_tbl = enc_f32 @ w_f32[:, :d_model].T                  # [max_len, D] f32
    dfn_l = dfn.reshape(n).astype(jnp.int32)
    dfn_fa_l = dfn_fa.reshape(n).astype(jnp.int32)
    pos = t_tbl[dfn_l] + t_tbl[dfn_fa_l] + bias.astype(jnp.float32)[None, :]

    wt = w_f32[:, d_model:].T                               # [D, D] token half

    # ---- lane-dense packing: group G rows so the last dim is >= 128 -------
    if d_model < 128 and 128 % d_model == 0:
        group = 128 // d_model
    else:
        group = 1
    lane = group * d_model

    # Block-diagonal weight: [Nr, G*D] @ [G*D, G*D] == row-major [N, D] @ [D, D]
    if group > 1:
        w_slab = jnp.zeros((lane, lane), jnp.float32)
        for g in range(group):
            w_slab = w_slab.at[g * d_model:(g + 1) * d_model,
                               g * d_model:(g + 1) * d_model].set(wt)
    else:
        w_slab = wt
    w_slab = w_slab.astype(jnp.bfloat16)

    # ---- row tiling / padding for the slab view ---------------------------
    n_rows = -(-n // group)
    # pos f32 + tok bf16 + out f32 (conservative), x2 buffers each
    bytes_per_row = lane * (4 + 2 + 4) * 2
    tm_cap = max(8, ((16 * 1024 * 1024) // bytes_per_row) // 8 * 8)
    tm = max(8, min(512, tm_cap, _round_up(n_rows, 8)))
    n_rows_pad = _round_up(n_rows, tm)
    n_pad = n_rows_pad * group

    tok_flat = tokens.reshape(n, d_model).astype(jnp.bfloat16)
    tok_flat = jnp.pad(tok_flat, ((0, n_pad - n), (0, 0)))
    pos = jnp.pad(pos, ((0, n_pad - n), (0, 0)))

    tok_slab = tok_flat.reshape(n_rows_pad, lane)
    pos_slab = pos.reshape(n_rows_pad, lane)

    out_slab = pl.pallas_call(
        _combine_kernel,
        out_shape=jax.ShapeDtypeStruct((n_rows_pad, lane), tokens.dtype),
        grid=(n_rows_pad // tm,),
        in_specs=[
            pl.BlockSpec((tm, lane), lambda i: (i, 0)),      # pos   (tiled)
            pl.BlockSpec((tm, lane), lambda i: (i, 0)),      # tok   (tiled)
            pl.BlockSpec((lane, lane), lambda i: (0, 0)),    # weight (resident)
        ],
        out_specs=pl.BlockSpec((tm, lane), lambda i: (i, 0)),
        compiler_params=pltpu.CompilerParams(
            dimension_semantics=("parallel",)),
    )(pos_slab, tok_slab, w_slab)

    out = out_slab.reshape(n_pad, d_model)[:n]
    return out.reshape(n_batch, n_part, d_model)


def make_sinusoidal_encoding(d_model, max_len):
    pos = jnp.arange(max_len, dtype=jnp.float32)[:, None]            # [L, 1]
    two_i = jnp.arange(0, d_model, 2, dtype=jnp.float32)[None, :]    # [1, D/2]
    angle = pos / (10000.0 ** (two_i / d_model))                     # [L, D/2]
    enc = jnp.zeros((max_len, d_model), dtype=jnp.float32)
    enc = enc.at[:, 0::2].set(jnp.sin(angle))
    enc = enc.at[:, 1::2].set(jnp.cos(angle))
    return enc


if __name__ == "__main__":
    d_model = 32
    max_len = 64
    n_batch, n_part = 2, 8

    key = jax.random.PRNGKey(0)
    k_tok, k_w, k_b, k_dfn, k_dfa = jax.random.split(key, 5)

    tokens = jax.random.normal(k_tok, (n_batch, n_part, d_model), dtype=jnp.float32)
    dfn = jax.random.randint(k_dfn, (n_batch, n_part), 0, max_len, dtype=jnp.int32)
    dfn_fa = jax.random.randint(k_dfa, (n_batch, n_part), 0, max_len, dtype=jnp.int32)

    # Deterministic nn.Linear(2*d_model, d_model) parameters.
    bound = 1.0 / jnp.sqrt(2.0 * d_model)
    weight = jax.random.uniform(k_w, (d_model, 2 * d_model), jnp.float32, -bound, bound)
    bias = jax.random.uniform(k_b, (d_model,), jnp.float32, -bound, bound)

    encoding = make_sinusoidal_encoding(d_model, max_len)

    out = native_cat_position_embedding(dfn, dfn_fa, tokens, encoding, weight, bias)
    out = jax.block_until_ready(out)

    # Pure-f32 reference (torch semantics).  The kernel runs the token-half
    # matmul in bf16 on the MXU, so compare with a relaxed tolerance.
    pos_ref = encoding[dfn.reshape(-1)] + encoding[dfn_fa.reshape(-1)]
    cat = jnp.concatenate([pos_ref, tokens.reshape(-1, d_model)], axis=-1)
    ref = (cat @ weight.T + bias).reshape(n_batch, n_part, d_model)
    assert out.shape == (n_batch, n_part, d_model)
    err = float(jnp.max(jnp.abs(out - ref)))
    assert jnp.allclose(out, ref, atol=5e-2, rtol=5e-2), err

    print("KERNEL_OK")
</pallas_src>

<mosaic_0001>
module attributes {stable_mosaic.version = 11 : i64} {
  func.func @_combine_kernel(%arg0: i32, %arg1: memref<8x128xf32, #tpu.memory_space<vmem>>, %arg2: memref<8x128xbf16, #tpu.memory_space<vmem>>, %arg3: memref<128x128xbf16, #tpu.memory_space<vmem>>, %arg4: memref<8x128xf32, #tpu.memory_space<vmem>>) attributes {dimension_semantics = [#tpu.dimension_semantics<parallel>], iteration_bounds = array<i64: 1>, scalar_prefetch = 0 : i64, scratch_operands = 0 : i64, tpu.core_type = #tpu.core_type<tc>, window_params = [{transform_indices = @transform_0, window_bounds = array<i64: 8, 128>}, {transform_indices = @transform_1, window_bounds = array<i64: 8, 128>}, {pipeline_mode = #tpu.pipeline_mode<synchronous>, transform_indices = @transform_2, window_bounds = array<i64: 128, 128>}, {transform_indices = @transform_3, window_bounds = array<i64: 8, 128>}]} {
    %c0 = arith.constant 0 : index
    %c0_0 = arith.constant 0 : index
    %0 = vector.load %arg2[%c0, %c0_0] : memref<8x128xbf16, #tpu.memory_space<vmem>>, vector<8x128xbf16>
    %c0_1 = arith.constant 0 : index
    %c0_2 = arith.constant 0 : index
    %1 = vector.load %arg3[%c0_1, %c0_2] : memref<128x128xbf16, #tpu.memory_space<vmem>>, vector<128x128xbf16>
    %cst = arith.constant dense<0.000000e+00> : vector<8x128xf32>
    %2 = tpu.matmul %0, %1, %cst {dimension_numbers = #tpu.dot_dimension_numbers<[1], [0], [0], [1], [0, 0, 1, 1], [], []>} : vector<8x128xbf16>, vector<128x128xbf16>, vector<8x128xf32> -> vector<8x128xf32>
    %c0_3 = arith.constant 0 : index
    %c0_4 = arith.constant 0 : index
    %3 = vector.load %arg1[%c0_3, %c0_4] : memref<8x128xf32, #tpu.memory_space<vmem>>, vector<8x128xf32>
    %4 = arith.addf %2, %3 : vector<8x128xf32>
    %c0_5 = arith.constant 0 : index
    %c0_6 = arith.constant 0 : index
    %5 = vector.load %arg4[%c0_5, %c0_6] : memref<8x128xf32, #tpu.memory_space<vmem>>, vector<8x128xf32>
    tpu.vector_store %arg4[%c0_5, %c0_6], %4 {strides = array<i32>} : memref<8x128xf32, #tpu.memory_space<vmem>>, vector<8x128xf32>,
    return
  }
  func.func @transform_0(%arg0: i32) -> (i32, i32) {
    %c0_i32 = arith.constant 0 : i32
    %c0_i32_0 = arith.constant 0 : i32
    return %arg0, %c0_i32 : i32, i32
  }
  func.func @transform_1(%arg0: i32) -> (i32, i32) {
    %c0_i32 = arith.constant 0 : i32
    %c0_i32_0 = arith.constant 0 : i32
    return %arg0, %c0_i32 : i32, i32
  }
  func.func @transform_2(%arg0: i32) -> (i32, i32) {
    %c0_i32 = arith.constant 0 : i32
    %c0_i32_0 = arith.constant 0 : i32
    %c0_i32_1 = arith.constant 0 : i32
    return %c0_i32, %c0_i32_0 : i32, i32
  }
  func.func @transform_3(%arg0: i32) -> (i32, i32) {
    %c0_i32 = arith.constant 0 : i32
    %c0_i32_0 = arith.constant 0 : i32
    return %arg0, %c0_i32 : i32, i32
  }
}

</mosaic_0001>

<llo_original>
// kernel: native_cat_position_embedding.1
$region0: #{native_cat_position_embedding.1}
  #allocation0 [shape = 'u32[]', space=smem, size = 0x4, offset = 0x4, fixed_abs, tag = 'smem constant byte address 0x4 - core index']
  #allocation1 [shape = 'u32[144,128]{1,0:T(1,128)}', space=vmem, size = 0x12000, scoped, tag = 'internal scratch']
  %s0 = inlined_call_operand.vmem [shape: f32[8,128], index: 0, kind: input, shape index: {}]
  %s1 = inlined_call_operand.vmem [shape: bf16[8,128], index: 1, kind: input, shape index: {}]
  %s2 = inlined_call_operand.vmem [shape: bf16[128,128], index: 2, kind: input, shape index: {}]
  %s3 = inlined_call_operand.vmem [shape: f32[8,128], index: 3, kind: output, shape index: {}]
  %s4 = sld [smem:[#allocation0]]
  $region22: #{native_cat_position_embedding.1} parent=0
    _
  %s6 = ssub.s32 1, %s4
  %s7 = scalar_select 0, %s6, %s4
  // Predicated region
  $region2: #{native_cat_position_embedding.1} parent=0 // pred_check
    _
  $region3: #{native_cat_position_embedding.1} parent=0 // pred_check_branch
    %9 = sbr.rel (0) target = $region5
  $region4: #{native_cat_position_embedding.1} parent=0 // pred_region
    _
  $region5: #{native_cat_position_embedding.1} parent=0 // pred_fallthru
    _
  // Predicated region
  $region6: #{native_cat_position_embedding.1} parent=0 // pred_check
    _
  $region7: #{native_cat_position_embedding.1} parent=0 // pred_check_branch
    %11 = sbr.rel (0) target = $region9
  $region8: #{native_cat_position_embedding.1} parent=0 // pred_region
    _
  $region9: #{native_cat_position_embedding.1} parent=0 // pred_fallthru
    _
  // Predicated region
  $region10: #{native_cat_position_embedding.1} parent=0 // pred_check
    _
  $region11: #{native_cat_position_embedding.1} parent=0 // pred_check_branch
    %13 = sbr.rel (0) target = $region13
  $region12: #{native_cat_position_embedding.1} parent=0 // pred_region
    _
  $region13: #{native_cat_position_embedding.1} parent=0 // pred_fallthru
    _
  %v15 = vld [vmem:[%s1] sm:$0xf]
  %v16 = vld [vmem:[%s2] sm:$0xf]
  %v17 = vld [vmem:[%s2 + $0x4] sm:$0xf]
  %v18 = vld [vmem:[%s2 + $0x8] sm:$0xf]
  %v19 = vld [vmem:[%s2 + $0xc] sm:$0xf]
  %v20 = vld [vmem:[%s2 + $0x10] sm:$0xf]
  %v21 = vld [vmem:[%s2 + $0x14] sm:$0xf]
  %v22 = vld [vmem:[%s2 + $0x18] sm:$0xf]
  %v23 = vld [vmem:[%s2 + $0x1c] sm:$0xf]
  %v24 = vld [vmem:[%s2 + $0x20] sm:$0xf]
  %v25 = vld [vmem:[%s2 + $0x24] sm:$0xf]
  %v26 = vld [vmem:[%s2 + $0x28] sm:$0xf]
  %v27 = vld [vmem:[%s2 + $0x2c] sm:$0xf]
  %v28 = vld [vmem:[%s2 + $0x30] sm:$0xf]
  %v29 = vld [vmem:[%s2 + $0x34] sm:$0xf]
  %v30 = vld [vmem:[%s2 + $0x38] sm:$0xf]
  %v31 = vld [vmem:[%s2 + $0x3c] sm:$0xf]
  %v32 = vld [vmem:[%s0] sm:$0xff]
  %v49 = vunpack.c.l.b16 %v16
  %v50 = vunpack.c.l.b16 %v17
  %v51 = vunpack.c.l.b16 %v18
  %v52 = vunpack.c.l.b16 %v19
  %v53 = vunpack.c.l.b16 %v20
  %v54 = vunpack.c.l.b16 %v21
  %v55 = vunpack.c.l.b16 %v22
  %v56 = vunpack.c.l.b16 %v23
  %v57 = vunpack.c.l.b16 %v24
  %v58 = vunpack.c.l.b16 %v25
  %v59 = vunpack.c.l.b16 %v26
  %v60 = vunpack.c.l.b16 %v27
  %v61 = vunpack.c.l.b16 %v28
  %v62 = vunpack.c.l.b16 %v29
  %v63 = vunpack.c.l.b16 %v30
  %v64 = vunpack.c.l.b16 %v31
  %v65 = vpack.c.b16 %v50, %v49
  %v66 = vpack.c.b16 %v52, %v51
  %v67 = vpack.c.b16 %v54, %v53
  %v68 = vpack.c.b16 %v56, %v55
  %v69 = vpack.c.b16 %v58, %v57
  %v70 = vpack.c.b16 %v60, %v59
  %v71 = vpack.c.b16 %v62, %v61
  %v72 = vpack.c.b16 %v64, %v63
  %81 = vmatprep.subr.bf16.mxu0 0
  %82 = vmatpush1.bf16.msra.mxu0 %v65
  %83 = vmatprep.subr.bf16.mxu0 0
  %84 = vmatpush1.bf16.msra.mxu0 %v66
  %85 = vmatprep.subr.bf16.mxu0 0
  %86 = vmatpush1.bf16.msra.mxu0 %v67
  %87 = vmatprep.subr.bf16.mxu0 0
  %88 = vmatpush1.bf16.msra.mxu0 %v68
  %89 = vmatprep.subr.bf16.mxu0 0
  %90 = vmatpush1.bf16.msra.mxu0 %v69
  %91 = vmatprep.subr.bf16.mxu0 0
  %92 = vmatpush1.bf16.msra.mxu0 %v70
  %93 = vmatprep.subr.bf16.mxu0 0
  %94 = vmatpush1.bf16.msra.mxu0 %v71
  %95 = vmatprep.subr.bf16.mxu0 0
  %96 = vmatpush1.bf16.msra.mxu0 %v72
  %97 = vmatprep.subr.bf16.mxu0 0
  %98 = vmatpush1.bf16.msra.mxu0 0
  %99 = vmatprep.subr.bf16.mxu0 0
  %100 = vmatpush1.bf16.msra.mxu0 0
  %101 = vmatprep.subr.bf16.mxu0 0
  %102 = vmatpush1.bf16.msra.mxu0 0
  %103 = vmatprep.subr.bf16.mxu0 0
  %104 = vmatpush1.bf16.msra.mxu0 0
  %105 = vmatprep.subr.bf16.mxu0 0
  %106 = vmatpush1.bf16.msra.mxu0 0
  %107 = vmatprep.subr.bf16.mxu0 0
  %108 = vmatpush1.bf16.msra.mxu0 0
  %109 = vmatprep.subr.bf16.mxu0 0
  %110 = vmatpush1.bf16.msra.mxu0 0
  %111 = vmatprep.subr.bf16.mxu0 0
  %112 = vmatpush1.bf16.msra.mxu0 0
  %113 = vmatprep.mubr.bf16.mxu0 0
  %114 = vmatmul.mubr.bf16.gmra.mrb[0].mxu0 %v15
  %v115 = vpop.f32.mrb[0].mxu0
  %v116 = vadd.f32 %v32, %v115
  %v117 = vpop.f32.mrb[0].mxu0
  %v118 = vpop.f32.mrb[0].mxu0
  %v119 = vpop.f32.mrb[0].mxu0
  %120 = vdwg.mxu0
  %121 = vst [vmem:[%s3] sm:$0xff] %v116
  // Predicated region
  $region14: #{native_cat_position_embedding.1} parent=0 // pred_check
    _
  $region15: #{native_cat_position_embedding.1} parent=0 // pred_check_branch
    %123 = sbr.rel (0) target = $region17
  $region16: #{native_cat_position_embedding.1} parent=0 // pred_region
    _
  $region17: #{native_cat_position_embedding.1} parent=0 // pred_fallthru
    _
  // Predicated region
  $region18: #{native_cat_position_embedding.1} parent=0 // pred_check
    _
  $region19: #{native_cat_position_embedding.1} parent=0 // pred_check_branch
    %125 = sbr.rel (0) target = $region21
  $region20: #{native_cat_position_embedding.1} parent=0 // pred_region
    _
  $region21: #{native_cat_position_embedding.1} parent=0 // pred_fallthru
    _

</llo_original>
